<compile_context>
chip_gen: v5e
topology: v5e:2x2
jax: 0.10.0
libtpu: 0.0.40
codegen_flags: <defaults>
</compile_context>

<pallas_src>
import functools

import jax
import jax.numpy as jnp
from jax import lax
from jax.experimental import pallas as pl
from jax.experimental.pallas import tpu as pltpu

_LANE = 1024          # lane-dense last dim (multiple of 128)
_MAX_TILE_ROWS = 512  # 512 x 1024 f32 = 2 MiB per block


def _dropout_kernel(seed_ref, x_ref, o_ref, *, threshold24: int, scale: float,
                    tile_r: int, lane: int):
    # Global element index of every position in this tile (uint32 counter).
    i = pl.program_id(0)
    row = lax.broadcasted_iota(jnp.uint32, (tile_r, lane), 0)
    col = lax.broadcasted_iota(jnp.uint32, (tile_r, lane), 1)
    base = (i * tile_r).astype(jnp.uint32)
    gid = (row + base) * jnp.uint32(lane) + col

    # Counter-based hash: golden-ratio multiply + seed, then murmur3 fmix32.
    seed = seed_ref[0].astype(jnp.uint32)
    h = gid * jnp.uint32(0x9E3779B9) + seed
    h = h ^ (h >> 16)
    h = h * jnp.uint32(0x85EBCA6B)
    h = h ^ (h >> 13)
    h = h * jnp.uint32(0xC2B2AE35)
    h = h ^ (h >> 16)

    # Integer-threshold keep decision on the top 24 random bits
    # (keep  <=>  uniform > p, matching torch.rand(x.shape) > p).
    keep = (h >> 8).astype(jnp.int32) >= jnp.int32(threshold24)

    x = x_ref[...]
    scaled = x * jnp.asarray(scale, dtype=x.dtype)
    o_ref[...] = jnp.where(keep, scaled, jnp.zeros_like(scaled))


def dropout(x: jax.Array, p: float, seed: int, training: bool = True) -> jax.Array:
    """Pallas TPU dropout (forward).  Any input shape; p = drop probability."""
    if not training or p <= 0.0:
        return x
    if p >= 1.0:
        return jnp.zeros_like(x)

    orig_shape = x.shape
    total = x.size

    # Lane-dense 2-D slab: (rows, _LANE), padded so blocks tile it exactly.
    rows = -(-total // _LANE)
    tile_r = min(_MAX_TILE_ROWS, ((rows + 7) // 8) * 8)   # multiple of 8
    rows_padded = -(-rows // tile_r) * tile_r
    padded_total = rows_padded * _LANE

    flat = x.reshape(-1)
    if padded_total != total:
        flat = jnp.pad(flat, (0, padded_total - total))
    x2d = flat.reshape(rows_padded, _LANE)

    threshold24 = min(int(round(float(p) * (1 << 24))), 1 << 24)
    scale = 1.0 / (1.0 - float(p))
    seed_arr = jnp.asarray([seed], dtype=jnp.int32)

    kernel = functools.partial(
        _dropout_kernel,
        threshold24=threshold24,
        scale=scale,
        tile_r=tile_r,
        lane=_LANE,
    )

    out2d = pl.pallas_call(
        kernel,
        out_shape=jax.ShapeDtypeStruct((rows_padded, _LANE), x.dtype),
        grid=(rows_padded // tile_r,),
        in_specs=[
            pl.BlockSpec(memory_space=pltpu.SMEM),             # seed scalar
            pl.BlockSpec((tile_r, _LANE), lambda i: (i, 0)),   # row tile of x
        ],
        out_specs=pl.BlockSpec((tile_r, _LANE), lambda i: (i, 0)),
        compiler_params=pltpu.CompilerParams(
            dimension_semantics=("parallel",),
        ),
    )(seed_arr, x2d)

    out = out2d.reshape(-1)
    if padded_total != total:
        out = out[:total]
    return out.reshape(orig_shape)


if __name__ == "__main__":
    key = jax.random.PRNGKey(0)
    # Small NCHW input consistent with typical usage of this module.
    x = jax.random.normal(key, (2, 4, 16, 16), dtype=jnp.float32)
    p = 0.3

    y = jax.block_until_ready(dropout(x, p=p, seed=1234, training=True))
    assert y.shape == x.shape and y.dtype == x.dtype

    # Surviving elements are exactly x * 1/(1-p); dropped elements are 0.
    kept = y != 0.0
    scale = 1.0 / (1.0 - p)
    assert jnp.allclose(y[kept], (x * scale)[kept], rtol=1e-6, atol=1e-6)
    drop_frac = 1.0 - float(jnp.mean(kept.astype(jnp.float32)))
    assert 0.1 < drop_frac < 0.5, f"implausible drop fraction {drop_frac}"

    # Deterministic per seed; different seeds give different masks.
    y2 = jax.block_until_ready(dropout(x, p=p, seed=1234, training=True))
    assert jnp.array_equal(y, y2)
    y3 = jax.block_until_ready(dropout(x, p=p, seed=4321, training=True))
    assert not jnp.array_equal(y, y3)

    # Eval mode is identity.
    y_eval = jax.block_until_ready(dropout(x, p=p, seed=1234, training=False))
    assert jnp.array_equal(y_eval, x)

    print("KERNEL_OK")
</pallas_src>

<mosaic_0001>
module attributes {stable_mosaic.version = 11 : i64} {
  func.func @_dropout_kernel(%arg0: i32, %arg1: memref<1xi32, #tpu.memory_space<smem>>, %arg2: memref<8x1024xf32, #tpu.memory_space<vmem>>, %arg3: memref<8x1024xf32, #tpu.memory_space<vmem>>) attributes {dimension_semantics = [#tpu.dimension_semantics<parallel>], iteration_bounds = array<i64: 1>, scalar_prefetch = 0 : i64, scratch_operands = 0 : i64, tpu.core_type = #tpu.core_type<tc>, window_params = [{transform_indices = @transform_0, window_bounds = array<i64: 1>}, {transform_indices = @transform_1, window_bounds = array<i64: 8, 1024>}, {transform_indices = @transform_2, window_bounds = array<i64: 8, 1024>}]} {
    %0 = tpu.iota {dimensions = array<i32: 0>} : vector<8x1024xi32>
    %1 = tpu.iota {dimensions = array<i32: 1>} : vector<8x1024xi32>
    %c8_i32 = arith.constant 8 : i32
    %2 = arith.muli %arg0, %c8_i32 : i32
    %3 = vector.broadcast %2 : i32 to vector<8x1024xi32>
    %4 = arith.addi %0, %3 : vector<8x1024xi32>
    %c1024_i32 = arith.constant 1024 : i32
    %5 = vector.broadcast %c1024_i32 : i32 to vector<8x1024xi32>
    %6 = arith.muli %4, %5 : vector<8x1024xi32>
    %7 = arith.addi %6, %1 : vector<8x1024xi32>
    %c0 = arith.constant 0 : index
    %8 = memref.load %arg1[%c0] : memref<1xi32, #tpu.memory_space<smem>>
    %c-1640531527_i32 = arith.constant -1640531527 : i32
    %9 = vector.broadcast %c-1640531527_i32 : i32 to vector<8x1024xi32>
    %10 = arith.muli %7, %9 : vector<8x1024xi32>
    %11 = vector.broadcast %8 : i32 to vector<8x1024xi32>
    %12 = arith.addi %10, %11 : vector<8x1024xi32>
    %c16_i32 = arith.constant 16 : i32
    %13 = vector.broadcast %c16_i32 : i32 to vector<8x1024xi32>
    %14 = arith.shrui %12, %13 : vector<8x1024xi32>
    %15 = arith.xori %12, %14 : vector<8x1024xi32>
    %c-2048144789_i32 = arith.constant -2048144789 : i32
    %16 = vector.broadcast %c-2048144789_i32 : i32 to vector<8x1024xi32>
    %17 = arith.muli %15, %16 : vector<8x1024xi32>
    %c13_i32 = arith.constant 13 : i32
    %18 = vector.broadcast %c13_i32 : i32 to vector<8x1024xi32>
    %19 = arith.shrui %17, %18 : vector<8x1024xi32>
    %20 = arith.xori %17, %19 : vector<8x1024xi32>
    %c-1028477387_i32 = arith.constant -1028477387 : i32
    %21 = vector.broadcast %c-1028477387_i32 : i32 to vector<8x1024xi32>
    %22 = arith.muli %20, %21 : vector<8x1024xi32>
    %c16_i32_0 = arith.constant 16 : i32
    %23 = vector.broadcast %c16_i32_0 : i32 to vector<8x1024xi32>
    %24 = arith.shrui %22, %23 : vector<8x1024xi32>
    %25 = arith.xori %22, %24 : vector<8x1024xi32>
    %c8_i32_1 = arith.constant 8 : i32
    %26 = vector.broadcast %c8_i32_1 : i32 to vector<8x1024xi32>
    %27 = arith.shrui %25, %26 : vector<8x1024xi32>
    %c5033165_i32 = arith.constant 5033165 : i32
    %28 = vector.broadcast %c5033165_i32 : i32 to vector<8x1024xi32>
    %29 = arith.cmpi sge, %27, %28 : vector<8x1024xi32>
    %c0_2 = arith.constant 0 : index
    %c0_3 = arith.constant 0 : index
    %30 = vector.load %arg2[%c0_2, %c0_3] : memref<8x1024xf32, #tpu.memory_space<vmem>>, vector<8x1024xf32>
    %cst = arith.constant 1.42857146 : f32
    %31 = vector.broadcast %cst : f32 to vector<8x1024xf32>
    %32 = arith.mulf %30, %31 : vector<8x1024xf32>
    %cst_4 = arith.constant 0.000000e+00 : f32
    %33 = vector.broadcast %cst_4 : f32 to vector<8x1024xf32>
    %34 = arith.select %29, %32, %33 : vector<8x1024xi1>, vector<8x1024xf32>
    %c0_5 = arith.constant 0 : index
    %c0_6 = arith.constant 0 : index
    %35 = vector.load %arg3[%c0_5, %c0_6] : memref<8x1024xf32, #tpu.memory_space<vmem>>, vector<8x1024xf32>
    tpu.vector_store %arg3[%c0_5, %c0_6], %34 {strides = array<i32>} : memref<8x1024xf32, #tpu.memory_space<vmem>>, vector<8x1024xf32>,
    return
  }
  func.func @transform_0(%arg0: i32) -> i32 {
    %c0_i32 = arith.constant 0 : i32
    %c0_i32_0 = arith.constant 0 : i32
    return %c0_i32 : i32
  }
  func.func @transform_1(%arg0: i32) -> (i32, i32) {
    %c0_i32 = arith.constant 0 : i32
    %c0_i32_0 = arith.constant 0 : i32
    return %arg0, %c0_i32 : i32, i32
  }
  func.func @transform_2(%arg0: i32) -> (i32, i32) {
    %c0_i32 = arith.constant 0 : i32
    %c0_i32_0 = arith.constant 0 : i32
    return %arg0, %c0_i32 : i32, i32
  }
}

</mosaic_0001>

<llo_original>
// kernel: tpu_custom_call.1
$region0: #{tpu_custom_call.1}
  #allocation0 [shape = 'u32[]', space=smem, size = 0x4, offset = 0x4, fixed_abs, tag = 'smem constant byte address 0x4 - core index']
  #allocation1 [shape = 'u32[72,128]{1,0:T(1,128)}', space=vmem, size = 0x9000, scoped, tag = 'internal scratch']
  #allocation2 [shape = 's32[1]{0:T(128)S(6)}', space=smem, size = 0x200, scoped, tag = 'scoped memory for tpu_custom_call.1']
  %s0 = inlined_call_operand.<no memory space> [shape: s32[1], index: 0, kind: input, shape index: {}]
  %s1 = inlined_call_operand.hbm [shape: f32[8,1024], index: 1, kind: input, shape index: {}]
  %s2 = inlined_call_operand.hbm [shape: f32[8,1024], index: 2, kind: output, shape index: {}]
  %s3 = sld [smem:[#allocation0]]
  $region22: #{tpu_custom_call.1} parent=0
    _
  %s5 = ssub.s32 1, %s3
  %s6 = scalar_select 0, %s5, %s3
  %7 = sst [smem:[#allocation2]] %s0
  $region1: #{tpu_custom_call.1} parent=0
    #allocation3 [shape = 'u8[32768]{0}', space=vmem, size = 0x8000, scoped, tag = 'input window, operand 1, single buffered']
    #allocation4 [shape = 's32[1]{0}', space=sflag, size = 0x4, scoped, tag = 'scoped memory for tpu_custom_call.1']
    #allocation5 [shape = 's32[1]{0}', space=sflag, size = 0x4, scoped, tag = 'scoped memory for tpu_custom_call.1']
    #allocation6 [shape = 'u8[32768]{0}', space=vmem, size = 0x8000, scoped, tag = 'output window, operand 0, single buffered']
    %8 = vsyncpa [#allocation4], 0
    %9 = vsyncpa [#allocation5], 0
    // Predicated region
    $region2: #{tpu_custom_call.1} parent=1 // pred_check
      _
    $region3: #{tpu_custom_call.1} parent=1 // pred_check_branch
      %11 = sbr.rel (0) target = $region5
    $region4: #{tpu_custom_call.1} parent=1 // pred_region
      _
    $region5: #{tpu_custom_call.1} parent=1 // pred_fallthru
      _
    // Predicated region
    $region6: #{tpu_custom_call.1} parent=1 // pred_check
      _
    $region7: #{tpu_custom_call.1} parent=1 // pred_check_branch
      %13 = sbr.rel (0) target = $region9
    $region8: #{tpu_custom_call.1} parent=1 // pred_region
      %15 = vsyncadd [#allocation4], 0
      %s17 = sshll.u32 %s1, 4
      %s18 = int_to_ptr.hbm [resolvable:$true] %s17
      %s19 = sshll.u32 [#allocation3], 4
      %s20 = int_to_ptr.vmem [resolvable:$true] %s19
      %22 = dma.hbm_to_vmem [thread:$0]  %s18, 1024, %s20, [#allocation4]
    $region9: #{tpu_custom_call.1} parent=1 // pred_fallthru
      _
    // Predicated region
    $region10: #{tpu_custom_call.1} parent=1 // pred_check
      _
    $region11: #{tpu_custom_call.1} parent=1 // pred_check_branch
      %24 = sbr.rel (0) target = $region13
    $region12: #{tpu_custom_call.1} parent=1 // pred_region
      %26 = dma.done [#allocation4], 1024
    $region13: #{tpu_custom_call.1} parent=1 // pred_fallthru
      _
    %v27 = vlaneseq
    %v28 = vshrl.u32 %v27, 7
    %v29 = vlaneseq
    %v30 = vand.u32 %v29, 127
    %v31 = vadd.s32 %v30, 128
    %v32 = vadd.s32 %v30, 256
    %v33 = vadd.s32 %v30, 384
    %v34 = vadd.s32 %v30, 512
    %v35 = vadd.s32 %v30, 640
    %v36 = vadd.s32 %v30, 768
    %v37 = vadd.s32 %v30, 896
    %s38 = smul.u32 0, 8
    %v39 = vstv %s38
    %v40 = vadd.s32 %v28, %v39
    %v41 = vmul.u32 %v40, 1024
    %v42 = vadd.s32 %v41, %v30
    %v43 = vadd.s32 %v41, %v31
    %v44 = vadd.s32 %v41, %v32
    %v45 = vadd.s32 %v41, %v33
    %v46 = vadd.s32 %v41, %v34
    %v47 = vadd.s32 %v41, %v35
    %v48 = vadd.s32 %v41, %v36
    %v49 = vadd.s32 %v41, %v37
    %s50 = sld [smem:[#allocation2]]
    %v51 = vmul.u32 %v42, 2654435769
    %v52 = vmul.u32 %v43, 2654435769
    %v53 = vmul.u32 %v44, 2654435769
    %v54 = vmul.u32 %v45, 2654435769
    %v55 = vmul.u32 %v46, 2654435769
    %v56 = vmul.u32 %v47, 2654435769
    %v57 = vmul.u32 %v48, 2654435769
    %v58 = vmul.u32 %v49, 2654435769
    %v59 = vstv %s50
    %v60 = vadd.s32 %v51, %v59
    %v61 = vadd.s32 %v52, %v59
    %v62 = vadd.s32 %v53, %v59
    %v63 = vadd.s32 %v54, %v59
    %v64 = vadd.s32 %v55, %v59
    %v65 = vadd.s32 %v56, %v59
    %v66 = vadd.s32 %v57, %v59
    %v67 = vadd.s32 %v58, %v59
    %v68 = vshrl.u32 %v60, 16
    %v69 = vshrl.u32 %v61, 16
    %v70 = vshrl.u32 %v62, 16
    %v71 = vshrl.u32 %v63, 16
    %v72 = vshrl.u32 %v64, 16
    %v73 = vshrl.u32 %v65, 16
    %v74 = vshrl.u32 %v66, 16
    %v75 = vshrl.u32 %v67, 16
    %v76 = vxor.u32 %v60, %v68
    %v77 = vxor.u32 %v61, %v69
    %v78 = vxor.u32 %v62, %v70
    %v79 = vxor.u32 %v63, %v71
    %v80 = vxor.u32 %v64, %v72
    %v81 = vxor.u32 %v65, %v73
    %v82 = vxor.u32 %v66, %v74
    %v83 = vxor.u32 %v67, %v75
    %v84 = vmul.u32 %v76, 2246822507
    %v85 = vmul.u32 %v77, 2246822507
    %v86 = vmul.u32 %v78, 2246822507
    %v87 = vmul.u32 %v79, 2246822507
    %v88 = vmul.u32 %v80, 2246822507
    %v89 = vmul.u32 %v81, 2246822507
    %v90 = vmul.u32 %v82, 2246822507
    %v91 = vmul.u32 %v83, 2246822507
    %v92 = vshrl.u32 %v84, 13
    %v93 = vshrl.u32 %v85, 13
    %v94 = vshrl.u32 %v86, 13
    %v95 = vshrl.u32 %v87, 13
    %v96 = vshrl.u32 %v88, 13
    %v97 = vshrl.u32 %v89, 13
    %v98 = vshrl.u32 %v90, 13
    %v99 = vshrl.u32 %v91, 13
    %v100 = vxor.u32 %v84, %v92
    %v101 = vxor.u32 %v85, %v93
    %v102 = vxor.u32 %v86, %v94
    %v103 = vxor.u32 %v87, %v95
    %v104 = vxor.u32 %v88, %v96
    %v105 = vxor.u32 %v89, %v97
    %v106 = vxor.u32 %v90, %v98
    %v107 = vxor.u32 %v91, %v99
    %v108 = vmul.u32 %v100, 3266489909
    %v109 = vmul.u32 %v101, 3266489909
    %v110 = vmul.u32 %v102, 3266489909
    %v111 = vmul.u32 %v103, 3266489909
    %v112 = vmul.u32 %v104, 3266489909
    %v113 = vmul.u32 %v105, 3266489909
    %v114 = vmul.u32 %v106, 3266489909
    %v115 = vmul.u32 %v107, 3266489909
    %v116 = vshrl.u32 %v108, 16
    %v117 = vshrl.u32 %v109, 16
    %v118 = vshrl.u32 %v110, 16
    %v119 = vshrl.u32 %v111, 16
    %v120 = vshrl.u32 %v112, 16
    %v121 = vshrl.u32 %v113, 16
    %v122 = vshrl.u32 %v114, 16
    %v123 = vshrl.u32 %v115, 16
    %v124 = vxor.u32 %v108, %v116
    %v125 = vxor.u32 %v109, %v117
    %v126 = vxor.u32 %v110, %v118
    %v127 = vxor.u32 %v111, %v119
    %v128 = vxor.u32 %v112, %v120
    %v129 = vxor.u32 %v113, %v121
    %v130 = vxor.u32 %v114, %v122
    %v131 = vxor.u32 %v115, %v123
    %v132 = vshrl.u32 %v124, 8
    %v133 = vshrl.u32 %v125, 8
    %v134 = vshrl.u32 %v126, 8
    %v135 = vshrl.u32 %v127, 8
    %v136 = vshrl.u32 %v128, 8
    %v137 = vshrl.u32 %v129, 8
    %v138 = vshrl.u32 %v130, 8
    %v139 = vshrl.u32 %v131, 8
    %vm140 = vcmp.ge.s32.totalorder %v132, 5033165
    %vm141 = vcmp.ge.s32.totalorder %v133, 5033165
    %vm142 = vcmp.ge.s32.totalorder %v134, 5033165
    %vm143 = vcmp.ge.s32.totalorder %v135, 5033165
    %vm144 = vcmp.ge.s32.totalorder %v136, 5033165
    %vm145 = vcmp.ge.s32.totalorder %v137, 5033165
    %vm146 = vcmp.ge.s32.totalorder %v138, 5033165
    %vm147 = vcmp.ge.s32.totalorder %v139, 5033165
    %v148 = vld [vmem:[#allocation3] sm:$0xff]
    %v149 = vld [vmem:[#allocation3 + $0x8] sm:$0xff]
    %v150 = vld [vmem:[#allocation3 + $0x10] sm:$0xff]
    %v151 = vld [vmem:[#allocation3 + $0x18] sm:$0xff]
    %v152 = vld [vmem:[#allocation3 + $0x20] sm:$0xff]
    %v153 = vld [vmem:[#allocation3 + $0x28] sm:$0xff]
    %v154 = vld [vmem:[#allocation3 + $0x30] sm:$0xff]
    %v155 = vld [vmem:[#allocation3 + $0x38] sm:$0xff]
    %v156 = vmul.f32 %v148, 1.4285715
    %v157 = vmul.f32 %v149, 1.4285715
    %v158 = vmul.f32 %v150, 1.4285715
    %v159 = vmul.f32 %v151, 1.4285715
    %v160 = vmul.f32 %v152, 1.4285715
    %v161 = vmul.f32 %v153, 1.4285715
    %v162 = vmul.f32 %v154, 1.4285715
    %v163 = vmul.f32 %v155, 1.4285715
    %v164 = vsel %vm140, %v156, 0.0
    %v165 = vsel %vm141, %v157, 0.0
    %v166 = vsel %vm142, %v158, 0.0
    %v167 = vsel %vm143, %v159, 0.0
    %v168 = vsel %vm144, %v160, 0.0
    %v169 = vsel %vm145, %v161, 0.0
    %v170 = vsel %vm146, %v162, 0.0
    %v171 = vsel %vm147, %v163, 0.0
    %172 = vst [vmem:[#allocation6] sm:$0xff] %v164
    %173 = vst [vmem:[#allocation6 + $0x8] sm:$0xff] %v165
    %174 = vst [vmem:[#allocation6 + $0x10] sm:$0xff] %v166
    %175 = vst [vmem:[#allocation6 + $0x18] sm:$0xff] %v167
    %176 = vst [vmem:[#allocation6 + $0x20] sm:$0xff] %v168
    %177 = vst [vmem:[#allocation6 + $0x28] sm:$0xff] %v169
    %178 = vst [vmem:[#allocation6 + $0x30] sm:$0xff] %v170
    %179 = vst [vmem:[#allocation6 + $0x38] sm:$0xff] %v171
    // Predicated region
    $region14: #{tpu_custom_call.1} parent=1 // pred_check
      _
    $region15: #{tpu_custom_call.1} parent=1 // pred_check_branch
      %181 = sbr.rel (0) target = $region17
    $region16: #{tpu_custom_call.1} parent=1 // pred_region
      %183 = vsyncadd [#allocation5], 0
      %s185 = sshll.u32 [#allocation6], 4
      %s186 = int_to_ptr.vmem [resolvable:$true] %s185
      %s187 = sshll.u32 %s2, 4
      %s188 = int_to_ptr.hbm [resolvable:$true] %s187
      %190 = dma.vmem_to_hbm [thread:$0]  %s186, 1024, %s188, [#allocation5]
    $region17: #{tpu_custom_call.1} parent=1 // pred_fallthru
      _
    // Predicated region
    $region18: #{tpu_custom_call.1} parent=1 // pred_check
      _
    $region19: #{tpu_custom_call.1} parent=1 // pred_check_branch
      %192 = sbr.rel (0) target = $region21
    $region20: #{tpu_custom_call.1} parent=1 // pred_region
      %194 = dma.done [#allocation5], 1024
    $region21: #{tpu_custom_call.1} parent=1 // pred_fallthru
      _
    %195 = vsyncpa [#allocation4], 1
    %196 = vsyncpa [#allocation5], 1

</llo_original>
